<compile_context>
chip_gen: v5e
topology: v5e:2x2
jax: 0.10.0
libtpu: 0.0.40
codegen_flags: <defaults>
</compile_context>

<pallas_src>
import dataclasses
import functools

import jax
import jax.numpy as jnp
from jax.experimental import pallas as pl
from jax.experimental.pallas import tpu as pltpu


@dataclasses.dataclass
class ViTModelConfig:
    input_size: int
    patch_size: int
    emb_dim: int
    num_layers: int
    num_heads: int
    mlp_dim: int
    num_classes: int = 2
    dropout_rate: float = 0.1


def _cdiv(a, b):
    return (a + b - 1) // b


def _round_up(x, m):
    return _cdiv(x, m) * m


def _patch_embed_kernel(x_ref, w_ref, b_ref, o_ref, *, compute_dtype):
    # x_ref: (tm, K) patches tile (f32 or compute_dtype) -- cast here, not in a wrapper pass
    # w_ref: (K, E)  full weight (grid-invariant, fetched once)
    # b_ref: (1, E)  f32 bias (grid-invariant)
    # o_ref: (tm, E) output tile
    x = x_ref[...].astype(compute_dtype)
    w = w_ref[...].astype(compute_dtype)
    acc = jnp.dot(x, w, preferred_element_type=jnp.float32)
    o_ref[...] = (acc + b_ref[...]).astype(o_ref.dtype)


def prepare_patch_embedding_params(weight, bias, compute_dtype=jnp.bfloat16):
    """Weight/bias prep (reshape + transpose + cast). Hoist/cache this outside the hot path."""
    E, C, P = weight.shape
    w2d = weight.reshape(E, C * P).T.astype(compute_dtype)   # (K, E), c-major / k-minor
    b2d = bias.reshape(1, E).astype(jnp.float32)             # f32 epilogue
    return w2d, b2d


def _choose_tm(M, K, E, out_itemsize, *, tm_cap=1024, vmem_budget=40 * 1024 * 1024):
    """Pick the row-tile size: big (amortizes per-step overhead), >=2 grid steps when
    M allows (v7x has 2 TensorCores), and under a VMEM budget safe on v7x's 64 MiB."""
    if M <= 8:
        return M                                   # block dim == array dim is always legal
    n_tiles = max(2, _cdiv(M, tm_cap))             # balanced tiles, no near-2x padding for M=tm+eps
    tm = min(tm_cap, _round_up(_cdiv(M, n_tiles), 8))

    def footprint(t):                              # conservative double-buffered estimate (f32 inputs)
        return 2 * t * K * 4 + 2 * K * E * 4 + 2 * E * 4 + 2 * t * E * out_itemsize

    while tm > 8 and footprint(tm) > vmem_budget:
        tm = max(8, _round_up(tm // 2, 8))
    return tm


def patch_embedding(x, weight, bias, patch_size, *,
                    compute_dtype=jnp.bfloat16, out_dtype=None):
    """Equivalent of PatchEmbedding.forward: Conv1d(stride == kernel_size) then transpose(1, 2).

    Precision contract: the matmul operands are cast to `compute_dtype` (default bfloat16,
    MXU-native); accumulation and bias add are float32; output dtype is `out_dtype`
    (defaults to x.dtype). Pass compute_dtype=jnp.float32 for bit-closer-to-PyTorch results.

    x:      (B, C, L)           float32, L % patch_size == 0
    weight: (E, C, patch_size)  Conv1d weight
    bias:   (E,)                Conv1d bias
    returns (B, L // patch_size, E)
    """
    B, C, L = x.shape
    E = weight.shape[0]
    NP = L // patch_size
    K = C * patch_size
    M = B * NP
    out_dtype = x.dtype if out_dtype is None else out_dtype

    # --- glue (plain JAX): patch extraction, no padding passes -----------------------
    if C == 1:
        # Pure view: no HBM copy; the compute_dtype cast happens inside the kernel.
        patches = x.reshape(M, K)
    else:
        # One transpose pass with the cast fused into it (c-major / k-minor layout,
        # matching the Conv1d weight (E, C, P) flattening).
        patches = (x.reshape(B, C, NP, patch_size)
                     .transpose(0, 2, 1, 3)
                     .reshape(M, K)
                     .astype(compute_dtype))

    # NOTE: in a real model, call prepare_patch_embedding_params once and reuse.
    w2d, b2d = prepare_patch_embedding_params(weight, bias, compute_dtype)

    tm = _choose_tm(M, K, E, jnp.dtype(out_dtype).itemsize)
    grid = (_cdiv(M, tm),)

    flops = 2 * M * K * E
    bytes_accessed = int(
        M * K * jnp.dtype(patches.dtype).itemsize
        + K * E * jnp.dtype(compute_dtype).itemsize
        + E * 4
        + M * E * jnp.dtype(out_dtype).itemsize
    )

    kernel = functools.partial(_patch_embed_kernel, compute_dtype=compute_dtype)

    out = pl.pallas_call(
        kernel,
        out_shape=jax.ShapeDtypeStruct((M, E), out_dtype),
        grid_spec=pltpu.PrefetchScalarGridSpec(
            num_scalar_prefetch=0,
            grid=grid,
            in_specs=[
                pl.BlockSpec((tm, K), lambda i: (i, 0)),   # row tiles, full (unpadded) K
                pl.BlockSpec((K, E), lambda i: (0, 0)),    # weight: grid-invariant, fetched once
                pl.BlockSpec((1, E), lambda i: (0, 0)),    # bias:   grid-invariant
            ],
            out_specs=pl.BlockSpec((tm, E), lambda i: (i, 0)),
        ),
        compiler_params=pltpu.CompilerParams(
            dimension_semantics=("parallel",),             # shard row tiles across v7x's 2 TCs
            vmem_limit_bytes=48 * 1024 * 1024,
        ),
        cost_estimate=pl.CostEstimate(
            flops=flops, transcendentals=0, bytes_accessed=bytes_accessed),
    )(patches, w2d, b2d)

    # Identical to PyTorch's x.transpose(1, 2) output layout; no padding to strip.
    return out.reshape(B, NP, E)


def _reference(x, weight, bias, patch_size, compute_dtype=jnp.float32):
    # Pure-JAX reference of Conv1d(stride=kernel_size) + transpose(1, 2).
    # compute_dtype lets us mimic the kernel's MXU feed precision for tight checks.
    B, C, L = x.shape
    E = weight.shape[0]
    NP = L // patch_size
    patches = x.reshape(B, C, NP, patch_size).transpose(0, 2, 1, 3)
    patches = patches.reshape(B, NP, C * patch_size)
    w2d = weight.reshape(E, C * patch_size)
    patches = patches.astype(compute_dtype).astype(jnp.float32)
    w2d = w2d.astype(compute_dtype).astype(jnp.float32)
    acc = jnp.einsum("bnk,ek->bne", patches, w2d, preferred_element_type=jnp.float32)
    return acc + bias[None, None, :]


def _check_case(B, in_channels, cfg, key):
    kx, kw, kb = jax.random.split(key, 3)
    x = jax.random.normal(kx, (B, in_channels, cfg.input_size), dtype=jnp.float32)
    weight = jax.random.normal(
        kw, (cfg.emb_dim, in_channels, cfg.patch_size), dtype=jnp.float32) * 0.1
    bias = jax.random.normal(kb, (cfg.emb_dim,), dtype=jnp.float32) * 0.1

    out = patch_embedding(x, weight, bias, cfg.patch_size)
    out = jax.block_until_ready(out)

    NP = cfg.input_size // cfg.patch_size
    assert out.shape == (B, NP, cfg.emb_dim), out.shape
    assert out.dtype == x.dtype, out.dtype

    # Tight check against a reference that mimics the kernel's bf16 MXU feed.
    ref_bf16 = _reference(x, weight, bias, cfg.patch_size, compute_dtype=jnp.bfloat16)
    assert jnp.allclose(out, ref_bf16, atol=1e-3, rtol=1e-3), "mismatch vs bf16-matched reference"

    # Loose check against the full-f32 module semantics (documented precision contract).
    ref_f32 = _reference(x, weight, bias, cfg.patch_size, compute_dtype=jnp.float32)
    assert jnp.allclose(out, ref_f32, atol=5e-2, rtol=5e-2), "mismatch vs f32 reference"
    return out


if __name__ == "__main__":
    key = jax.random.PRNGKey(0)
    k1, k2, k3 = jax.random.split(key, 3)

    # Case 1: module defaults (C == 1 view fast path), single grid step.
    cfg1 = ViTModelConfig(
        input_size=16, patch_size=4, emb_dim=32,
        num_layers=1, num_heads=2, mlp_dim=64,
    )
    _check_case(B=2, in_channels=1, cfg=cfg1, key=k1)

    # Case 2: multi-channel path (c-major patch flattening, non-128 K / E), multi-tile grid.
    cfg2 = ViTModelConfig(
        input_size=256, patch_size=16, emb_dim=192,
        num_layers=1, num_heads=2, mlp_dim=64,
    )
    _check_case(B=4, in_channels=3, cfg=cfg2, key=k2)

    # Case 3: M not divisible by the row tile -> exercises the masked partial edge block
    # (replaces the old pad-M + post-slice path).
    cfg3 = ViTModelConfig(
        input_size=40, patch_size=4, emb_dim=64,
        num_layers=1, num_heads=2, mlp_dim=64,
    )
    _check_case(B=3, in_channels=2, cfg=cfg3, key=k3)

    print("KERNEL_OK")
</pallas_src>

<mosaic_0001>
module attributes {stable_mosaic.version = 11 : i64} {
  func.func @_patch_embed_kernel(%arg0: i32, %arg1: memref<8x4xf32, #tpu.memory_space<vmem>>, %arg2: memref<4x32xbf16, #tpu.memory_space<vmem>>, %arg3: memref<1x32xf32, #tpu.memory_space<vmem>>, %arg4: memref<8x32xf32, #tpu.memory_space<vmem>>) attributes {dimension_semantics = [#tpu.dimension_semantics<parallel>], iteration_bounds = array<i64: 1>, scalar_prefetch = 0 : i64, scratch_operands = 0 : i64, tpu.core_type = #tpu.core_type<tc>, window_params = [{transform_indices = @transform_0, window_bounds = array<i64: 8, 4>}, {pipeline_mode = #tpu.pipeline_mode<synchronous>, transform_indices = @transform_1, window_bounds = array<i64: 4, 32>}, {pipeline_mode = #tpu.pipeline_mode<synchronous>, transform_indices = @transform_2, window_bounds = array<i64: 1, 32>}, {transform_indices = @transform_3, window_bounds = array<i64: 8, 32>}]} {
    %c0 = arith.constant 0 : index
    %c0_0 = arith.constant 0 : index
    %0 = vector.load %arg1[%c0, %c0_0] : memref<8x4xf32, #tpu.memory_space<vmem>>, vector<8x4xf32>
    %1 = arith.truncf %0 : vector<8x4xf32> to vector<8x4xbf16>
    %c0_1 = arith.constant 0 : index
    %c0_2 = arith.constant 0 : index
    %2 = vector.load %arg2[%c0_1, %c0_2] : memref<4x32xbf16, #tpu.memory_space<vmem>>, vector<4x32xbf16>
    %cst = arith.constant dense<0.000000e+00> : vector<8x32xf32>
    %3 = tpu.matmul %1, %2, %cst {dimension_numbers = #tpu.dot_dimension_numbers<[1], [0], [0], [1], [0, 0, 1, 1], [], []>} : vector<8x4xbf16>, vector<4x32xbf16>, vector<8x32xf32> -> vector<8x32xf32>
    %c0_3 = arith.constant 0 : index
    %c0_4 = arith.constant 0 : index
    %4 = vector.load %arg3[%c0_3, %c0_4] : memref<1x32xf32, #tpu.memory_space<vmem>>, vector<1x32xf32>
    %5 = vector.broadcast %4 : vector<1x32xf32> to vector<8x32xf32>
    %6 = arith.addf %3, %5 : vector<8x32xf32>
    %c0_5 = arith.constant 0 : index
    %c0_6 = arith.constant 0 : index
    %7 = vector.load %arg4[%c0_5, %c0_6] : memref<8x32xf32, #tpu.memory_space<vmem>>, vector<8x32xf32>
    tpu.vector_store %arg4[%c0_5, %c0_6], %6 {strides = array<i32>} : memref<8x32xf32, #tpu.memory_space<vmem>>, vector<8x32xf32>,
    return
  }
  func.func @transform_0(%arg0: i32) -> (i32, i32) {
    %c0_i32 = arith.constant 0 : i32
    %c0_i32_0 = arith.constant 0 : i32
    return %arg0, %c0_i32 : i32, i32
  }
  func.func @transform_1(%arg0: i32) -> (i32, i32) {
    %c0_i32 = arith.constant 0 : i32
    %c0_i32_0 = arith.constant 0 : i32
    %c0_i32_1 = arith.constant 0 : i32
    return %c0_i32, %c0_i32_0 : i32, i32
  }
  func.func @transform_2(%arg0: i32) -> (i32, i32) {
    %c0_i32 = arith.constant 0 : i32
    %c0_i32_0 = arith.constant 0 : i32
    %c0_i32_1 = arith.constant 0 : i32
    return %c0_i32, %c0_i32_0 : i32, i32
  }
  func.func @transform_3(%arg0: i32) -> (i32, i32) {
    %c0_i32 = arith.constant 0 : i32
    %c0_i32_0 = arith.constant 0 : i32
    return %arg0, %c0_i32 : i32, i32
  }
}

</mosaic_0001>

<llo_original>
// kernel: tpu_custom_call.1
$region0: #{tpu_custom_call.1}
  #allocation0 [shape = 'u32[]', space=smem, size = 0x4, offset = 0x4, fixed_abs, tag = 'smem constant byte address 0x4 - core index']
  #allocation1 [shape = 'u32[72,128]{1,0:T(1,128)}', space=vmem, size = 0x9000, scoped, tag = 'internal scratch']
  %s0 = inlined_call_operand.vmem [shape: f32[8,4], index: 0, kind: input, shape index: {}]
  %s1 = inlined_call_operand.vmem [shape: bf16[4,32], index: 1, kind: input, shape index: {}]
  %s2 = inlined_call_operand.vmem [shape: f32[1,32], index: 2, kind: input, shape index: {}]
  %s3 = inlined_call_operand.hbm [shape: f32[8,32], index: 3, kind: output, shape index: {}]
  %s4 = sld [smem:[#allocation0]]
  $region22: #{tpu_custom_call.1} parent=0
    _
  %s6 = ssub.s32 1, %s4
  %s7 = scalar_select 0, %s6, %s4
  $region1: #{tpu_custom_call.1} parent=0
    #allocation2 [shape = 'u8[4096]{0}', space=vmem, size = 0x1000, scoped, tag = 'output window, operand 0, single buffered']
    #allocation3 [shape = 's32[1]{0}', space=sflag, size = 0x4, scoped, tag = 'scoped memory for tpu_custom_call.1']
    %8 = vsyncpa [#allocation3], 0
    // Predicated region
    $region2: #{tpu_custom_call.1} parent=1 // pred_check
      _
    $region3: #{tpu_custom_call.1} parent=1 // pred_check_branch
      %10 = sbr.rel (0) target = $region5
    $region4: #{tpu_custom_call.1} parent=1 // pred_region
      _
    $region5: #{tpu_custom_call.1} parent=1 // pred_fallthru
      _
    // Predicated region
    $region6: #{tpu_custom_call.1} parent=1 // pred_check
      _
    $region7: #{tpu_custom_call.1} parent=1 // pred_check_branch
      %12 = sbr.rel (0) target = $region9
    $region8: #{tpu_custom_call.1} parent=1 // pred_region
      _
    $region9: #{tpu_custom_call.1} parent=1 // pred_fallthru
      _
    // Predicated region
    $region10: #{tpu_custom_call.1} parent=1 // pred_check
      _
    $region11: #{tpu_custom_call.1} parent=1 // pred_check_branch
      %14 = sbr.rel (0) target = $region13
    $region12: #{tpu_custom_call.1} parent=1 // pred_region
      _
    $region13: #{tpu_custom_call.1} parent=1 // pred_fallthru
      _
    %v16 = vld [vmem:[%s0] sm:$0xff]
    %v17 = vpack.c.bf16 %v16, %v16
    %v18 = vld [vmem:[%s1] sm:$0x3]
    %v19 = vld [vmem:[%s2] sm:$0x1]
    %v21 = vperm.slane %v19, 0
    %vm23 = vcmask 31744
    %v25 = vsel %vm23, %v17, 0
    %vm27 = vcmask 1041408
    %v29 = vsel %vm27, %v18, 0
    %31 = vmatpush.bf16.msra.mxu0 0
    %32 = vmatpush.bf16.msra.mxu0 0
    %33 = vmatpush.bf16.msra.mxu0 0
    %34 = vmatpush.bf16.msra.mxu0 0
    %35 = vmatpush.bf16.msra.mxu0 0
    %36 = vmatpush.bf16.msra.mxu0 0
    %37 = vmatpush.bf16.msra.mxu0 0
    %38 = vmatpush.bf16.msra.mxu0 %v29
    %39 = vmatmul.bf16.gmra.mxu0 %v25
    %v40 = vpop.f32.mrf.mxu0
    %v41 = vadd.f32 %v21, %v40
    %v42 = vpop.f32.mrf.mxu0
    %43 = vdwg.mxu0
    %vm44 = vcmask 261120
    %45 = vst.msk [vmem:[#allocation2] sm:$0xff] %vm44, %v41
    // Predicated region
    $region14: #{tpu_custom_call.1} parent=1 // pred_check
      _
    $region15: #{tpu_custom_call.1} parent=1 // pred_check_branch
      %47 = sbr.rel (0) target = $region17
    $region16: #{tpu_custom_call.1} parent=1 // pred_region
      %49 = vsyncadd [#allocation3], 0
      %s51 = sshll.u32 [#allocation2], 4
      %s52 = int_to_ptr.vmem [resolvable:$true] %s51
      %s53 = sshll.u32 %s3, 4
      %s54 = int_to_ptr.hbm [resolvable:$true] %s53
      %56 = dma.vmem_to_hbm [thread:$0]  %s52, 128, %s54, [#allocation3]
    $region17: #{tpu_custom_call.1} parent=1 // pred_fallthru
      _
    // Predicated region
    $region18: #{tpu_custom_call.1} parent=1 // pred_check
      _
    $region19: #{tpu_custom_call.1} parent=1 // pred_check_branch
      %58 = sbr.rel (0) target = $region21
    $region20: #{tpu_custom_call.1} parent=1 // pred_region
      %60 = dma.done [#allocation3], 128
    $region21: #{tpu_custom_call.1} parent=1 // pred_fallthru
      _
    %61 = vsyncpa [#allocation3], 1

</llo_original>
